<compile_context>
chip_gen: v5e
topology: v5e:2x2
jax: 0.10.0
libtpu: 0.0.40
codegen_flags: <defaults>
</compile_context>

<pallas_src>
import functools
import math

import jax
import jax.numpy as jnp
from jax.experimental import pallas as pl
from jax.experimental.pallas import tpu as pltpu


# ----------------------------------------------------------------------------
# Fused forward kernel (single invocation, whole working set in VMEM / vregs)
# ----------------------------------------------------------------------------
def fused_forward_kernel(x_ref, wih_ref, whh_ref, b_ref, fc1w_ref, fc1b_ref,
                         *rest, T, B, H, n_deep):
    # x_ref:    (T*B, F)   time-major, flattened input
    # wih_ref:  (F, 4H)    gate columns permuted to [i, f, o, g]
    # whh_ref:  (H, 4H)    gate columns permuted to [i, f, o, g]
    # b_ref:    (1, 4H)    fused bias_ih + bias_hh, permuted to [i, f, o, g]
    # fc1w_ref: (T*H, Hfc), fc1b_ref: (1, Hfc)
    # rest:     dnn_w0, dnn_b0, ..., dnn_w{n-1}, dnn_b{n-1}, out_ref
    dnn_refs = rest[:2 * n_deep]
    out_ref = rest[-1]

    Hfc = fc1w_ref.shape[1]

    whh = whh_ref[...]

    # Hoisted input projection + bias: one matmul / one broadcast-add for ALL steps.
    gates_x = jnp.dot(x_ref[...], wih_ref[...],
                      preferred_element_type=jnp.float32) + b_ref[...]   # (T*B, 4H)

    c = jnp.zeros((B, H), jnp.float32)
    h = jnp.zeros((B, H), jnp.float32)
    # fc1 bias folded into the accumulator init -> no separate add later.
    fc1_acc = jnp.broadcast_to(fc1b_ref[...], (B, Hfc)).astype(jnp.float32)

    # Statically unrolled recurrence (T is small and fixed).
    for t in range(T):
        gx = gates_x[t * B:(t + 1) * B, :]                               # (B, 4H)
        if t == 0:
            gates = gx                                                   # h0 == 0
        else:
            gates = gx + jnp.dot(h, whh, preferred_element_type=jnp.float32)
        # Permuted gate layout [i, f, o, g]: one sigmoid over 3H, one tanh over H.
        sig = jax.nn.sigmoid(gates[:, :3 * H])
        g_g = jnp.tanh(gates[:, 3 * H:])
        i_g = sig[:, :H]
        f_g = sig[:, H:2 * H]
        o_g = sig[:, 2 * H:3 * H]
        c = f_g * c + i_g * g_g
        h = o_g * jnp.tanh(c)
        # Fold fc1 into the loop:  sum_t h_t @ fc1_w[t*H:(t+1)*H]  ==  flat @ fc1_w
        fc1_acc = fc1_acc + jnp.dot(h, fc1w_ref[pl.ds(t * H, H), :],
                                    preferred_element_type=jnp.float32)

    y = fc1_acc                                                          # (B, Hfc)

    # dnn: [ReLU -> Linear (-> Dropout=identity)] * n_deep, last maps to n_outputs.
    for i in range(n_deep):
        w = dnn_refs[2 * i][...]
        bb = dnn_refs[2 * i + 1][...]
        y = jnp.dot(jnp.maximum(y, 0.0), w,
                    preferred_element_type=jnp.float32) + bb

    out_ref[...] = y


def _permute_gate_cols(w):
    """Reorder last-axis gate blocks from PyTorch [i, f, g, o] to [i, f, o, g]."""
    H = w.shape[-1] // 4
    return jnp.concatenate(
        [w[..., :2 * H], w[..., 3 * H:], w[..., 2 * H:3 * H]], axis=-1)


def lstm_forecaster_forward(params, x):
    """x: (B, T, F) -> (B, n_outputs). Single fused pallas_call."""
    B, T, F = x.shape
    H = params["whh_t"].shape[0]
    n_deep = len(params["dnn"])
    n_out = params["dnn"][-1][0].shape[1]

    # One-time prep (tiny XLA ops): gate-column permutation + time-major flatten.
    wih_p = _permute_gate_cols(params["wih_t"])
    whh_p = _permute_gate_cols(params["whh_t"])
    b_p = _permute_gate_cols(params["b_lstm"])
    x_flat = jnp.transpose(x, (1, 0, 2)).reshape(T * B, F)

    dnn_flat = []
    for (w_t, b) in params["dnn"]:
        dnn_flat += [w_t, b]

    vmem = pl.BlockSpec(memory_space=pltpu.MemorySpace.VMEM)
    n_inputs = 6 + 2 * n_deep
    kernel = functools.partial(fused_forward_kernel, T=T, B=B, H=H, n_deep=n_deep)
    return pl.pallas_call(
        kernel,
        out_shape=jax.ShapeDtypeStruct((B, n_out), jnp.float32),
        in_specs=[vmem] * n_inputs,
        out_specs=vmem,
    )(x_flat, wih_p, whh_p, b_p, params["fc1_w_t"], params["fc1_b"], *dnn_flat)


# ----------------------------------------------------------------------------
# Parameter construction (deterministic, PyTorch-style uniform init, gate order i,f,g,o)
# ----------------------------------------------------------------------------
def init_params(key, n_features, n_hidden_lstm, n_hidden_fc, n_outputs,
                sequence_len, n_deep_layers):
    def uniform(key, shape, bound):
        return jax.random.uniform(key, shape, jnp.float32, -bound, bound)

    keys = jax.random.split(key, 8 + 2 * n_deep_layers)
    k = iter(keys)
    H = n_hidden_lstm
    kl = 1.0 / math.sqrt(H)
    params = {}
    # LSTM params stored pre-transposed: (F, 4H), (H, 4H); fused bias (1, 4H)
    params["wih_t"] = uniform(next(k), (n_features, 4 * H), kl)
    params["whh_t"] = uniform(next(k), (H, 4 * H), kl)
    b_ih = uniform(next(k), (4 * H,), kl)
    b_hh = uniform(next(k), (4 * H,), kl)
    params["b_lstm"] = (b_ih + b_hh).reshape(1, 4 * H)

    # fc1: Linear(H * sequence_len -> n_hidden_fc)
    fan_in = H * sequence_len
    kf = 1.0 / math.sqrt(fan_in)
    params["fc1_w_t"] = uniform(next(k), (fan_in, n_hidden_fc), kf)
    params["fc1_b"] = uniform(next(k), (1, n_hidden_fc), kf)

    # dnn: n_deep_layers linears, each preceded by ReLU; last maps to n_outputs
    kd = 1.0 / math.sqrt(n_hidden_fc)
    dnn = []
    for i in range(n_deep_layers):
        out_dim = n_outputs if i == n_deep_layers - 1 else n_hidden_fc
        w_t = uniform(next(k), (n_hidden_fc, out_dim), kd)
        b = uniform(next(k), (1, out_dim), kd)
        dnn.append((w_t, b))
    params["dnn"] = dnn
    return params


# ----------------------------------------------------------------------------
# Pure-JAX reference (unpermuted weights, standard i,f,g,o slicing)
# ----------------------------------------------------------------------------
def reference_forward(params, x):
    B, T, F = x.shape
    H = params["whh_t"].shape[0]

    def step(carry, x_t):
        h, c = carry
        gates = x_t @ params["wih_t"] + h @ params["whh_t"] + params["b_lstm"]
        i_g = jax.nn.sigmoid(gates[:, :H])
        f_g = jax.nn.sigmoid(gates[:, H:2 * H])
        g_g = jnp.tanh(gates[:, 2 * H:3 * H])
        o_g = jax.nn.sigmoid(gates[:, 3 * H:])
        c = f_g * c + i_g * g_g
        h = o_g * jnp.tanh(c)
        return (h, c), h

    x_tbf = jnp.transpose(x, (1, 0, 2))
    (_, _), outs = jax.lax.scan(step, (jnp.zeros((B, H)), jnp.zeros((B, H))), x_tbf)
    flat = jnp.transpose(outs, (1, 0, 2)).reshape(B, -1)
    y = flat @ params["fc1_w_t"] + params["fc1_b"]
    for (w_t, b) in params["dnn"]:
        y = jnp.maximum(y, 0.0) @ w_t + b
    return y


if __name__ == "__main__":
    # Small config consistent with the module's constructor
    batch = 2
    n_features = 4
    n_hidden_lstm = 32
    n_hidden_fc = 64
    n_outputs = 8
    sequence_len = 8
    n_deep_layers = 3

    key = jax.random.PRNGKey(0)
    k_params, k_x = jax.random.split(key)
    params = init_params(k_params, n_features, n_hidden_lstm, n_hidden_fc,
                         n_outputs, sequence_len, n_deep_layers)
    x = jax.random.normal(k_x, (batch, sequence_len, n_features), jnp.float32)

    # TODO(synk): train-mode dropout not modeled (eval mode -> identity).
    out = lstm_forecaster_forward(params, x)
    out = jax.block_until_ready(out)
    assert out.shape == (batch, n_outputs), out.shape

    ref = jax.block_until_ready(reference_forward(params, x))
    assert jnp.allclose(out, ref, rtol=1e-2, atol=1e-2), (
        f"max abs diff {jnp.max(jnp.abs(out - ref))}")

    print("KERNEL_OK")
</pallas_src>

<mosaic_0001>
module attributes {stable_mosaic.version = 11 : i64} {
  func.func @fused_forward_kernel(%arg0: memref<16x4xf32, #tpu.memory_space<vmem>>, %arg1: memref<4x128xf32, #tpu.memory_space<vmem>>, %arg2: memref<32x128xf32, #tpu.memory_space<vmem>>, %arg3: memref<1x128xf32, #tpu.memory_space<vmem>>, %arg4: memref<256x64xf32, #tpu.memory_space<vmem>>, %arg5: memref<1x64xf32, #tpu.memory_space<vmem>>, %arg6: memref<64x64xf32, #tpu.memory_space<vmem>>, %arg7: memref<1x64xf32, #tpu.memory_space<vmem>>, %arg8: memref<64x64xf32, #tpu.memory_space<vmem>>, %arg9: memref<1x64xf32, #tpu.memory_space<vmem>>, %arg10: memref<64x8xf32, #tpu.memory_space<vmem>>, %arg11: memref<1x8xf32, #tpu.memory_space<vmem>>, %arg12: memref<2x8xf32, #tpu.memory_space<vmem>>) attributes {dimension_semantics = [], scalar_prefetch = 0 : i64, scratch_operands = 0 : i64, tpu.core_type = #tpu.core_type<tc>} {
    %c0 = arith.constant 0 : index
    %c0_0 = arith.constant 0 : index
    %0 = vector.load %arg2[%c0, %c0_0] : memref<32x128xf32, #tpu.memory_space<vmem>>, vector<32x128xf32>
    %c0_1 = arith.constant 0 : index
    %c0_2 = arith.constant 0 : index
    %1 = vector.load %arg0[%c0_1, %c0_2] : memref<16x4xf32, #tpu.memory_space<vmem>>, vector<16x4xf32>
    %c0_3 = arith.constant 0 : index
    %c0_4 = arith.constant 0 : index
    %2 = vector.load %arg1[%c0_3, %c0_4] : memref<4x128xf32, #tpu.memory_space<vmem>>, vector<4x128xf32>
    %cst = arith.constant dense<0.000000e+00> : vector<16x128xf32>
    %3 = tpu.matmul %1, %2, %cst {dimension_numbers = #tpu.dot_dimension_numbers<[1], [0], [0], [1], [0, 0, 1, 1], [], []>} : vector<16x4xf32>, vector<4x128xf32>, vector<16x128xf32> -> vector<16x128xf32>
    %c0_5 = arith.constant 0 : index
    %c0_6 = arith.constant 0 : index
    %4 = vector.load %arg3[%c0_5, %c0_6] : memref<1x128xf32, #tpu.memory_space<vmem>>, vector<1x128xf32>
    %5 = vector.broadcast %4 : vector<1x128xf32> to vector<16x128xf32>
    %6 = arith.addf %3, %5 : vector<16x128xf32>
    %cst_7 = arith.constant 0.000000e+00 : f32
    %7 = vector.broadcast %cst_7 : f32 to vector<2x32xf32>
    %c0_8 = arith.constant 0 : index
    %c0_9 = arith.constant 0 : index
    %8 = vector.load %arg5[%c0_8, %c0_9] : memref<1x64xf32, #tpu.memory_space<vmem>>, vector<1x64xf32>
    %9 = vector.shape_cast %8 : vector<1x64xf32> to vector<1x64xf32>
    %10 = vector.broadcast %9 : vector<1x64xf32> to vector<2x64xf32>
    %11 = vector.extract_strided_slice %6 {offsets = [0, 0], sizes = [2, 128], strides = [1, 1]} : vector<16x128xf32> to vector<2x128xf32>
    %12 = vector.extract_strided_slice %11 {offsets = [0, 0], sizes = [2, 96], strides = [1, 1]} : vector<2x128xf32> to vector<2x96xf32>
    %13 = arith.negf %12 : vector<2x96xf32>
    %14 = math.exp %13 : vector<2x96xf32>
    %cst_10 = arith.constant 1.000000e+00 : f32
    %15 = vector.broadcast %cst_10 : f32 to vector<2x96xf32>
    %16 = arith.addf %15, %14 : vector<2x96xf32>
    %17 = arith.divf %15, %16 : vector<2x96xf32>
    %18 = vector.extract_strided_slice %11 {offsets = [0, 96], sizes = [2, 32], strides = [1, 1]} : vector<2x128xf32> to vector<2x32xf32>
    %19 = math.tanh %18 : vector<2x32xf32>
    %20 = vector.extract_strided_slice %17 {offsets = [0, 0], sizes = [2, 32], strides = [1, 1]} : vector<2x96xf32> to vector<2x32xf32>
    %21 = vector.extract_strided_slice %17 {offsets = [0, 32], sizes = [2, 32], strides = [1, 1]} : vector<2x96xf32> to vector<2x32xf32>
    %22 = vector.extract_strided_slice %17 {offsets = [0, 64], sizes = [2, 32], strides = [1, 1]} : vector<2x96xf32> to vector<2x32xf32>
    %23 = arith.mulf %21, %7 : vector<2x32xf32>
    %24 = arith.mulf %20, %19 : vector<2x32xf32>
    %25 = arith.addf %23, %24 : vector<2x32xf32>
    %26 = math.tanh %25 : vector<2x32xf32>
    %27 = arith.mulf %22, %26 : vector<2x32xf32>
    %c0_11 = arith.constant 0 : index
    %c0_12 = arith.constant 0 : index
    %28 = vector.load %arg4[%c0_11, %c0_12] : memref<256x64xf32, #tpu.memory_space<vmem>>, vector<32x64xf32>
    %cst_13 = arith.constant dense<0.000000e+00> : vector<2x64xf32>
    %29 = tpu.matmul %27, %28, %cst_13 {dimension_numbers = #tpu.dot_dimension_numbers<[1], [0], [0], [1], [0, 0, 1, 1], [], []>} : vector<2x32xf32>, vector<32x64xf32>, vector<2x64xf32> -> vector<2x64xf32>
    %30 = arith.addf %10, %29 : vector<2x64xf32>
    %31 = vector.extract_strided_slice %6 {offsets = [2, 0], sizes = [2, 128], strides = [1, 1]} : vector<16x128xf32> to vector<2x128xf32>
    %cst_14 = arith.constant dense<0.000000e+00> : vector<2x128xf32>
    %32 = tpu.matmul %27, %0, %cst_14 {dimension_numbers = #tpu.dot_dimension_numbers<[1], [0], [0], [1], [0, 0, 1, 1], [], []>} : vector<2x32xf32>, vector<32x128xf32>, vector<2x128xf32> -> vector<2x128xf32>
    %33 = arith.addf %31, %32 : vector<2x128xf32>
    %34 = vector.extract_strided_slice %33 {offsets = [0, 0], sizes = [2, 96], strides = [1, 1]} : vector<2x128xf32> to vector<2x96xf32>
    %35 = arith.negf %34 : vector<2x96xf32>
    %36 = math.exp %35 : vector<2x96xf32>
    %cst_15 = arith.constant 1.000000e+00 : f32
    %37 = vector.broadcast %cst_15 : f32 to vector<2x96xf32>
    %38 = arith.addf %37, %36 : vector<2x96xf32>
    %39 = arith.divf %37, %38 : vector<2x96xf32>
    %40 = vector.extract_strided_slice %33 {offsets = [0, 96], sizes = [2, 32], strides = [1, 1]} : vector<2x128xf32> to vector<2x32xf32>
    %41 = math.tanh %40 : vector<2x32xf32>
    %42 = vector.extract_strided_slice %39 {offsets = [0, 0], sizes = [2, 32], strides = [1, 1]} : vector<2x96xf32> to vector<2x32xf32>
    %43 = vector.extract_strided_slice %39 {offsets = [0, 32], sizes = [2, 32], strides = [1, 1]} : vector<2x96xf32> to vector<2x32xf32>
    %44 = vector.extract_strided_slice %39 {offsets = [0, 64], sizes = [2, 32], strides = [1, 1]} : vector<2x96xf32> to vector<2x32xf32>
    %45 = arith.mulf %43, %25 : vector<2x32xf32>
    %46 = arith.mulf %42, %41 : vector<2x32xf32>
    %47 = arith.addf %45, %46 : vector<2x32xf32>
    %48 = math.tanh %47 : vector<2x32xf32>
    %49 = arith.mulf %44, %48 : vector<2x32xf32>
    %c32 = arith.constant 32 : index
    %c0_16 = arith.constant 0 : index
    %50 = vector.load %arg4[%c32, %c0_16] : memref<256x64xf32, #tpu.memory_space<vmem>>, vector<32x64xf32>
    %cst_17 = arith.constant dense<0.000000e+00> : vector<2x64xf32>
    %51 = tpu.matmul %49, %50, %cst_17 {dimension_numbers = #tpu.dot_dimension_numbers<[1], [0], [0], [1], [0, 0, 1, 1], [], []>} : vector<2x32xf32>, vector<32x64xf32>, vector<2x64xf32> -> vector<2x64xf32>
    %52 = arith.addf %30, %51 : vector<2x64xf32>
    %53 = vector.extract_strided_slice %6 {offsets = [4, 0], sizes = [2, 128], strides = [1, 1]} : vector<16x128xf32> to vector<2x128xf32>
    %cst_18 = arith.constant dense<0.000000e+00> : vector<2x128xf32>
    %54 = tpu.matmul %49, %0, %cst_18 {dimension_numbers = #tpu.dot_dimension_numbers<[1], [0], [0], [1], [0, 0, 1, 1], [], []>} : vector<2x32xf32>, vector<32x128xf32>, vector<2x128xf32> -> vector<2x128xf32>
    %55 = arith.addf %53, %54 : vector<2x128xf32>
    %56 = vector.extract_strided_slice %55 {offsets = [0, 0], sizes = [2, 96], strides = [1, 1]} : vector<2x128xf32> to vector<2x96xf32>
    %57 = arith.negf %56 : vector<2x96xf32>
    %58 = math.exp %57 : vector<2x96xf32>
    %cst_19 = arith.constant 1.000000e+00 : f32
    %59 = vector.broadcast %cst_19 : f32 to vector<2x96xf32>
    %60 = arith.addf %59, %58 : vector<2x96xf32>
    %61 = arith.divf %59, %60 : vector<2x96xf32>
    %62 = vector.extract_strided_slice %55 {offsets = [0, 96], sizes = [2, 32], strides = [1, 1]} : vector<2x128xf32> to vector<2x32xf32>
    %63 = math.tanh %62 : vector<2x32xf32>
    %64 = vector.extract_strided_slice %61 {offsets = [0, 0], sizes = [2, 32], strides = [1, 1]} : vector<2x96xf32> to vector<2x32xf32>
    %65 = vector.extract_strided_slice %61 {offsets = [0, 32], sizes = [2, 32], strides = [1, 1]} : vector<2x96xf32> to vector<2x32xf32>
    %66 = vector.extract_strided_slice %61 {offsets = [0, 64], sizes = [2, 32], strides = [1, 1]} : vector<2x96xf32> to vector<2x32xf32>
    %67 = arith.mulf %65, %47 : vector<2x32xf32>
    %68 = arith.mulf %64, %63 : vector<2x32xf32>
    %69 = arith.addf %67, %68 : vector<2x32xf32>
    %70 = math.tanh %69 : vector<2x32xf32>
    %71 = arith.mulf %66, %70 : vector<2x32xf32>
    %c64 = arith.constant 64 : index
    %c0_20 = arith.constant 0 : index
    %72 = vector.load %arg4[%c64, %c0_20] : memref<256x64xf32, #tpu.memory_space<vmem>>, vector<32x64xf32>
    %cst_21 = arith.constant dense<0.000000e+00> : vector<2x64xf32>
    %73 = tpu.matmul %71, %72, %cst_21 {dimension_numbers = #tpu.dot_dimension_numbers<[1], [0], [0], [1], [0, 0, 1, 1], [], []>} : vector<2x32xf32>, vector<32x64xf32>, vector<2x64xf32> -> vector<2x64xf32>
    %74 = arith.addf %52, %73 : vector<2x64xf32>
    %75 = vector.extract_strided_slice %6 {offsets = [6, 0], sizes = [2, 128], strides = [1, 1]} : vector<16x128xf32> to vector<2x128xf32>
    %cst_22 = arith.constant dense<0.000000e+00> : vector<2x128xf32>
    %76 = tpu.matmul %71, %0, %cst_22 {dimension_numbers = #tpu.dot_dimension_numbers<[1], [0], [0], [1], [0, 0, 1, 1], [], []>} : vector<2x32xf32>, vector<32x128xf32>, vector<2x128xf32> -> vector<2x128xf32>
    %77 = arith.addf %75, %76 : vector<2x128xf32>
    %78 = vector.extract_strided_slice %77 {offsets = [0, 0], sizes = [2, 96], strides = [1, 1]} : vector<2x128xf32> to vector<2x96xf32>
    %79 = arith.negf %78 : vector<2x96xf32>
    %80 = math.exp %79 : vector<2x96xf32>
    %cst_23 = arith.constant 1.000000e+00 : f32
    %81 = vector.broadcast %cst_23 : f32 to vector<2x96xf32>
    %82 = arith.addf %81, %80 : vector<2x96xf32>
    %83 = arith.divf %81, %82 : vector<2x96xf32>
    %84 = vector.extract_strided_slice %77 {offsets = [0, 96], sizes = [2, 32], strides = [1, 1]} : vector<2x128xf32> to vector<2x32xf32>
    %85 = math.tanh %84 : vector<2x32xf32>
    %86 = vector.extract_strided_slice %83 {offsets = [0, 0], sizes = [2, 32], strides = [1, 1]} : vector<2x96xf32> to vector<2x32xf32>
    %87 = vector.extract_strided_slice %83 {offsets = [0, 32], sizes = [2, 32], strides = [1, 1]} : vector<2x96xf32> to vector<2x32xf32>
    %88 = vector.extract_strided_slice %83 {offsets = [0, 64], sizes = [2, 32], strides = [1, 1]} : vector<2x96xf32> to vector<2x32xf32>
    %89 = arith.mulf %87, %69 : vector<2x32xf32>
    %90 = arith.mulf %86, %85 : vector<2x32xf32>
    %91 = arith.addf %89, %90 : vector<2x32xf32>
    %92 = math.tanh %91 : vector<2x32xf32>
    %93 = arith.mulf %88, %92 : vector<2x32xf32>
    %c96 = arith.constant 96 : index
    %c0_24 = arith.constant 0 : index
    %94 = vector.load %arg4[%c96, %c0_24] : memref<256x64xf32, #tpu.memory_space<vmem>>, vector<32x64xf32>
    %cst_25 = arith.constant dense<0.000000e+00> : vector<2x64xf32>
    %95 = tpu.matmul %93, %94, %cst_25 {dimension_numbers = #tpu.dot_dimension_numbers<[1], [0], [0], [1], [0, 0, 1, 1], [], []>} : vector<2x32xf32>, vector<32x64xf32>, vector<2x64xf32> -> vector<2x64xf32>
    %96 = arith.addf %74, %95 : vector<2x64xf32>
    %97 = vector.extract_strided_slice %6 {offsets = [8, 0], sizes = [2, 128], strides = [1, 1]} : vector<16x128xf32> to vector<2x128xf32>
    %cst_26 = arith.constant dense<0.000000e+00> : vector<2x128xf32>
    %98 = tpu.matmul %93, %0, %cst_26 {dimension_numbers = #tpu.dot_dimension_numbers<[1], [0], [0], [1], [0, 0, 1, 1], [], []>} : vector<2x32xf32>, vector<32x128xf32>, vector<2x128xf32> -> vector<2x128xf32>
    %99 = arith.addf %97, %98 : vector<2x128xf32>
    %100 = vector.extract_strided_slice %99 {offsets = [0, 0], sizes = [2, 96], strides = [1, 1]} : vector<2x128xf32> to vector<2x96xf32>
    %101 = arith.negf %100 : vector<2x96xf32>
    %102 = math.exp %101 : vector<2x96xf32>
    %cst_27 = arith.constant 1.000000e+00 : f32
    %103 = vector.broadcast %cst_27 : f32 to vector<2x96xf32>
    %104 = arith.addf %103, %102 : vector<2x96xf32>
    %105 = arith.divf %103, %104 : vector<2x96xf32>
    %106 = vector.extract_strided_slice %99 {offsets = [0, 96], sizes = [2, 32], strides = [1, 1]} : vector<2x128xf32> to vector<2x32xf32>
    %107 = math.tanh %106 : vector<2x32xf32>
    %108 = vector.extract_strided_slice %105 {offsets = [0, 0], sizes = [2, 32], strides = [1, 1]} : vector<2x96xf32> to vector<2x32xf32>
    %109 = vector.extract_strided_slice %105 {offsets = [0, 32], sizes = [2, 32], strides = [1, 1]} : vector<2x96xf32> to vector<2x32xf32>
    %110 = vector.extract_strided_slice %105 {offsets = [0, 64], sizes = [2, 32], strides = [1, 1]} : vector<2x96xf32> to vector<2x32xf32>
    %111 = arith.mulf %109, %91 : vector<2x32xf32>
    %112 = arith.mulf %108, %107 : vector<2x32xf32>
    %113 = arith.addf %111, %112 : vector<2x32xf32>
    %114 = math.tanh %113 : vector<2x32xf32>
    %115 = arith.mulf %110, %114 : vector<2x32xf32>
    %c128 = arith.constant 128 : index
    %c0_28 = arith.constant 0 : index
    %116 = vector.load %arg4[%c128, %c0_28] : memref<256x64xf32, #tpu.memory_space<vmem>>, vector<32x64xf32>
    %cst_29 = arith.constant dense<0.000000e+00> : vector<2x64xf32>
    %117 = tpu.matmul %115, %116, %cst_29 {dimension_numbers = #tpu.dot_dimension_numbers<[1], [0], [0], [1], [0, 0, 1, 1], [], []>} : vector<2x32xf32>, vector<32x64xf32>, vector<2x64xf32> -> vector<2x64xf32>
    %118 = arith.addf %96, %117 : vector<2x64xf32>
    %119 = vector.extract_strided_slice %6 {offsets = [10, 0], sizes = [2, 128], strides = [1, 1]} : vector<16x128xf32> to vector<2x128xf32>
    %cst_30 = arith.constant dense<0.000000e+00> : vector<2x128xf32>
    %120 = tpu.matmul %115, %0, %cst_30 {dimension_numbers = #tpu.dot_dimension_numbers<[1], [0], [0], [1], [0, 0, 1, 1], [], []>} : vector<2x32xf32>, vector<32x128xf32>, vector<2x128xf32> -> vector<2x128xf32>
    %121 = arith.addf %119, %120 : vector<2x128xf32>
    %122 = vector.extract_strided_slice %121 {offsets = [0, 0], sizes = [2, 96], strides = [1, 1]} : vector<2x128xf32> to vector<2x96xf32>
    %123 = arith.negf %122 : vector<2x96xf32>
    %124 = math.exp %123 : vector<2x96xf32>
    %cst_31 = arith.constant 1.000000e+00 : f32
    %125 = vector.broadcast %cst_31 : f32 to vector<2x96xf32>
    %126 = arith.addf %125, %124 : vector<2x96xf32>
    %127 = arith.divf %125, %126 : vector<2x96xf32>
    %128 = vector.extract_strided_slice %121 {offsets = [0, 96], sizes = [2, 32], strides = [1, 1]} : vector<2x128xf32> to vector<2x32xf32>
    %129 = math.tanh %128 : vector<2x32xf32>
    %130 = vector.extract_strided_slice %127 {offsets = [0, 0], sizes = [2, 32], strides = [1, 1]} : vector<2x96xf32> to vector<2x32xf32>
    %131 = vector.extract_strided_slice %127 {offsets = [0, 32], sizes = [2, 32], strides = [1, 1]} : vector<2x96xf32> to vector<2x32xf32>
    %132 = vector.extract_strided_slice %127 {offsets = [0, 64], sizes = [2, 32], strides = [1, 1]} : vector<2x96xf32> to vector<2x32xf32>
    %133 = arith.mulf %131, %113 : vector<2x32xf32>
    %134 = arith.mulf %130, %129 : vector<2x32xf32>
    %135 = arith.addf %133, %134 : vector<2x32xf32>
    %136 = math.tanh %135 : vector<2x32xf32>
    %137 = arith.mulf %132, %136 : vector<2x32xf32>
    %c160 = arith.constant 160 : index
    %c0_32 = arith.constant 0 : index
    %138 = vector.load %arg4[%c160, %c0_32] : memref<256x64xf32, #tpu.memory_space<vmem>>, vector<32x64xf32>
    %cst_33 = arith.constant dense<0.000000e+00> : vector<2x64xf32>
    %139 = tpu.matmul %137, %138, %cst_33 {dimension_numbers = #tpu.dot_dimension_numbers<[1], [0], [0], [1], [0, 0, 1, 1], [], []>} : vector<2x32xf32>, vector<32x64xf32>, vector<2x64xf32> -> vector<2x64xf32>
    %140 = arith.addf %118, %139 : vector<2x64xf32>
    %141 = vector.extract_strided_slice %6 {offsets = [12, 0], sizes = [2, 128], strides = [1, 1]} : vector<16x128xf32> to vector<2x128xf32>
    %cst_34 = arith.constant dense<0.000000e+00> : vector<2x128xf32>
    %142 = tpu.matmul %137, %0, %cst_34 {dimension_numbers = #tpu.dot_dimension_numbers<[1], [0], [0], [1], [0, 0, 1, 1], [], []>} : vector<2x32xf32>, vector<32x128xf32>, vector<2x128xf32> -> vector<2x128xf32>
    %143 = arith.addf %141, %142 : vector<2x128xf32>
    %144 = vector.extract_strided_slice %143 {offsets = [0, 0], sizes = [2, 96], strides = [1, 1]} : vector<2x128xf32> to vector<2x96xf32>
    %145 = arith.negf %144 : vector<2x96xf32>
    %146 = math.exp %145 : vector<2x96xf32>
    %cst_35 = arith.constant 1.000000e+00 : f32
    %147 = vector.broadcast %cst_35 : f32 to vector<2x96xf32>
    %148 = arith.addf %147, %146 : vector<2x96xf32>
    %149 = arith.divf %147, %148 : vector<2x96xf32>
    %150 = vector.extract_strided_slice %143 {offsets = [0, 96], sizes = [2, 32], strides = [1, 1]} : vector<2x128xf32> to vector<2x32xf32>
    %151 = math.tanh %150 : vector<2x32xf32>
    %152 = vector.extract_strided_slice %149 {offsets = [0, 0], sizes = [2, 32], strides = [1, 1]} : vector<2x96xf32> to vector<2x32xf32>
    %153 = vector.extract_strided_slice %149 {offsets = [0, 32], sizes = [2, 32], strides = [1, 1]} : vector<2x96xf32> to vector<2x32xf32>
    %154 = vector.extract_strided_slice %149 {offsets = [0, 64], sizes = [2, 32], strides = [1, 1]} : vector<2x96xf32> to vector<2x32xf32>
    %155 = arith.mulf %153, %135 : vector<2x32xf32>
    %156 = arith.mulf %152, %151 : vector<2x32xf32>
    %157 = arith.addf %155, %156 : vector<2x32xf32>
    %158 = math.tanh %157 : vector<2x32xf32>
    %159 = arith.mulf %154, %158 : vector<2x32xf32>
    %c192 = arith.constant 192 : index
    %c0_36 = arith.constant 0 : index
    %160 = vector.load %arg4[%c192, %c0_36] : memref<256x64xf32, #tpu.memory_space<vmem>>, vector<32x64xf32>
    %cst_37 = arith.constant dense<0.000000e+00> : vector<2x64xf32>
    %161 = tpu.matmul %159, %160, %cst_37 {dimension_numbers = #tpu.dot_dimension_numbers<[1], [0], [0], [1], [0, 0, 1, 1], [], []>} : vector<2x32xf32>, vector<32x64xf32>, vector<2x64xf32> -> vector<2x64xf32>
    %162 = arith.addf %140, %161 : vector<2x64xf32>
    %163 = vector.extract_strided_slice %6 {offsets = [14, 0], sizes = [2, 128], strides = [1, 1]} : vector<16x128xf32> to vector<2x128xf32>
    %cst_38 = arith.constant dense<0.000000e+00> : vector<2x128xf32>
    %164 = tpu.matmul %159, %0, %cst_38 {dimension_numbers = #tpu.dot_dimension_numbers<[1], [0], [0], [1], [0, 0, 1, 1], [], []>} : vector<2x32xf32>, vector<32x128xf32>, vector<2x128xf32> -> vector<2x128xf32>
    %165 = arith.addf %163, %164 : vector<2x128xf32>
    %166 = vector.extract_strided_slice %165 {offsets = [0, 0], sizes = [2, 96], strides = [1, 1]} : vector<2x128xf32> to vector<2x96xf32>
    %167 = arith.negf %166 : vector<2x96xf32>
    %168 = math.exp %167 : vector<2x96xf32>
    %cst_39 = arith.constant 1.000000e+00 : f32
    %169 = vector.broadcast %cst_39 : f32 to vector<2x96xf32>
    %170 = arith.addf %169, %168 : vector<2x96xf32>
    %171 = arith.divf %169, %170 : vector<2x96xf32>
    %172 = vector.extract_strided_slice %165 {offsets = [0, 96], sizes = [2, 32], strides = [1, 1]} : vector<2x128xf32> to vector<2x32xf32>
    %173 = math.tanh %172 : vector<2x32xf32>
    %174 = vector.extract_strided_slice %171 {offsets = [0, 0], sizes = [2, 32], strides = [1, 1]} : vector<2x96xf32> to vector<2x32xf32>
    %175 = vector.extract_strided_slice %171 {offsets = [0, 32], sizes = [2, 32], strides = [1, 1]} : vector<2x96xf32> to vector<2x32xf32>
    %176 = vector.extract_strided_slice %171 {offsets = [0, 64], sizes = [2, 32], strides = [1, 1]} : vector<2x96xf32> to vector<2x32xf32>
    %177 = arith.mulf %175, %157 : vector<2x32xf32>
    %178 = arith.mulf %174, %173 : vector<2x32xf32>
    %179 = arith.addf %177, %178 : vector<2x32xf32>
    %180 = math.tanh %179 : vector<2x32xf32>
    %181 = arith.mulf %176, %180 : vector<2x32xf32>
    %c224 = arith.constant 224 : index
    %c0_40 = arith.constant 0 : index
    %182 = vector.load %arg4[%c224, %c0_40] : memref<256x64xf32, #tpu.memory_space<vmem>>, vector<32x64xf32>
    %cst_41 = arith.constant dense<0.000000e+00> : vector<2x64xf32>
    %183 = tpu.matmul %181, %182, %cst_41 {dimension_numbers = #tpu.dot_dimension_numbers<[1], [0], [0], [1], [0, 0, 1, 1], [], []>} : vector<2x32xf32>, vector<32x64xf32>, vector<2x64xf32> -> vector<2x64xf32>
    %184 = arith.addf %162, %183 : vector<2x64xf32>
    %c0_42 = arith.constant 0 : index
    %c0_43 = arith.constant 0 : index
    %185 = vector.load %arg6[%c0_42, %c0_43] : memref<64x64xf32, #tpu.memory_space<vmem>>, vector<64x64xf32>
    %c0_44 = arith.constant 0 : index
    %c0_45 = arith.constant 0 : index
    %186 = vector.load %arg7[%c0_44, %c0_45] : memref<1x64xf32, #tpu.memory_space<vmem>>, vector<1x64xf32>
    %cst_46 = arith.constant 0.000000e+00 : f32
    %187 = vector.broadcast %cst_46 : f32 to vector<2x64xf32>
    %188 = arith.maximumf %184, %187 : vector<2x64xf32>
    %cst_47 = arith.constant dense<0.000000e+00> : vector<2x64xf32>
    %189 = tpu.matmul %188, %185, %cst_47 {dimension_numbers = #tpu.dot_dimension_numbers<[1], [0], [0], [1], [0, 0, 1, 1], [], []>} : vector<2x64xf32>, vector<64x64xf32>, vector<2x64xf32> -> vector<2x64xf32>
    %190 = vector.broadcast %186 : vector<1x64xf32> to vector<2x64xf32>
    %191 = arith.addf %189, %190 : vector<2x64xf32>
    %c0_48 = arith.constant 0 : index
    %c0_49 = arith.constant 0 : index
    %192 = vector.load %arg8[%c0_48, %c0_49] : memref<64x64xf32, #tpu.memory_space<vmem>>, vector<64x64xf32>
    %c0_50 = arith.constant 0 : index
    %c0_51 = arith.constant 0 : index
    %193 = vector.load %arg9[%c0_50, %c0_51] : memref<1x64xf32, #tpu.memory_space<vmem>>, vector<1x64xf32>
    %cst_52 = arith.constant 0.000000e+00 : f32
    %194 = vector.broadcast %cst_52 : f32 to vector<2x64xf32>
    %195 = arith.maximumf %191, %194 : vector<2x64xf32>
    %cst_53 = arith.constant dense<0.000000e+00> : vector<2x64xf32>
    %196 = tpu.matmul %195, %192, %cst_53 {dimension_numbers = #tpu.dot_dimension_numbers<[1], [0], [0], [1], [0, 0, 1, 1], [], []>} : vector<2x64xf32>, vector<64x64xf32>, vector<2x64xf32> -> vector<2x64xf32>
    %197 = vector.broadcast %193 : vector<1x64xf32> to vector<2x64xf32>
    %198 = arith.addf %196, %197 : vector<2x64xf32>
    %c0_54 = arith.constant 0 : index
    %c0_55 = arith.constant 0 : index
    %199 = vector.load %arg10[%c0_54, %c0_55] : memref<64x8xf32, #tpu.memory_space<vmem>>, vector<64x8xf32>
    %c0_56 = arith.constant 0 : index
    %c0_57 = arith.constant 0 : index
    %200 = vector.load %arg11[%c0_56, %c0_57] : memref<1x8xf32, #tpu.memory_space<vmem>>, vector<1x8xf32>
    %cst_58 = arith.constant 0.000000e+00 : f32
    %201 = vector.broadcast %cst_58 : f32 to vector<2x64xf32>
    %202 = arith.maximumf %198, %201 : vector<2x64xf32>
    %cst_59 = arith.constant dense<0.000000e+00> : vector<2x8xf32>
    %203 = tpu.matmul %202, %199, %cst_59 {dimension_numbers = #tpu.dot_dimension_numbers<[1], [0], [0], [1], [0, 0, 1, 1], [], []>} : vector<2x64xf32>, vector<64x8xf32>, vector<2x8xf32> -> vector<2x8xf32>
    %204 = vector.broadcast %200 : vector<1x8xf32> to vector<2x8xf32>
    %205 = arith.addf %203, %204 : vector<2x8xf32>
    %c0_60 = arith.constant 0 : index
    %c0_61 = arith.constant 0 : index
    %206 = vector.load %arg12[%c0_60, %c0_61] : memref<2x8xf32, #tpu.memory_space<vmem>>, vector<2x8xf32>
    tpu.vector_store %arg12[%c0_60, %c0_61], %205 {strides = array<i32>} : memref<2x8xf32, #tpu.memory_space<vmem>>, vector<2x8xf32>,
    return
  }
}

</mosaic_0001>

<llo_original>
// kernel: tpu_custom_call.1
$region0: #{tpu_custom_call.1}
  #allocation0 [shape = 'u32[]', space=smem, size = 0x4, offset = 0x4, fixed_abs, tag = 'smem constant byte address 0x4 - core index']
  #allocation1 [shape = 'u32[72,128]{1,0:T(1,128)}', space=vmem, size = 0x9000, scoped, tag = 'internal scratch']
  %s0 = inlined_call_operand.vmem [shape: f32[16,4], index: 0, kind: input, shape index: {}]
  %s1 = inlined_call_operand.vmem [shape: f32[4,128], index: 1, kind: input, shape index: {}]
  %s2 = inlined_call_operand.vmem [shape: f32[32,128], index: 2, kind: input, shape index: {}]
  %s3 = inlined_call_operand.vmem [shape: f32[1,128], index: 3, kind: input, shape index: {}]
  %s4 = inlined_call_operand.vmem [shape: f32[256,64], index: 4, kind: input, shape index: {}]
  %s5 = inlined_call_operand.vmem [shape: f32[1,64], index: 5, kind: input, shape index: {}]
  %s6 = inlined_call_operand.vmem [shape: f32[64,64], index: 6, kind: input, shape index: {}]
  %s7 = inlined_call_operand.vmem [shape: f32[1,64], index: 7, kind: input, shape index: {}]
  %s8 = inlined_call_operand.vmem [shape: f32[64,64], index: 8, kind: input, shape index: {}]
  %s9 = inlined_call_operand.vmem [shape: f32[1,64], index: 9, kind: input, shape index: {}]
  %s10 = inlined_call_operand.vmem [shape: f32[64,8], index: 10, kind: input, shape index: {}]
  %s11 = inlined_call_operand.vmem [shape: f32[1,8], index: 11, kind: input, shape index: {}]
  %s12 = inlined_call_operand.hbm [shape: f32[2,8], index: 12, kind: output, shape index: {}]
  %s13 = sld [smem:[#allocation0]]
  $region58: #{tpu_custom_call.1} parent=0
    _
  %s15 = ssub.s32 1, %s13
  %s16 = scalar_select 0, %s15, %s13
  $region1: #{tpu_custom_call.1} parent=0
    #allocation2 [shape = 'u8[1024]{0}', space=vmem, size = 0x400, scoped, tag = 'output window, operand 0, single buffered']
    #allocation3 [shape = 's32[1]{0}', space=sflag, size = 0x4, scoped, tag = 'scoped memory for tpu_custom_call.1']
    %17 = vsyncpa [#allocation3], 0
    // Predicated region
    $region2: #{tpu_custom_call.1} parent=1 // pred_check
      _
    $region3: #{tpu_custom_call.1} parent=1 // pred_check_branch
      %19 = sbr.rel (0) target = $region5
    $region4: #{tpu_custom_call.1} parent=1 // pred_region
      _
    $region5: #{tpu_custom_call.1} parent=1 // pred_fallthru
      _
    // Predicated region
    $region6: #{tpu_custom_call.1} parent=1 // pred_check
      _
    $region7: #{tpu_custom_call.1} parent=1 // pred_check_branch
      %21 = sbr.rel (0) target = $region9
    $region8: #{tpu_custom_call.1} parent=1 // pred_region
      _
    $region9: #{tpu_custom_call.1} parent=1 // pred_fallthru
      _
    // Predicated region
    $region10: #{tpu_custom_call.1} parent=1 // pred_check
      _
    $region11: #{tpu_custom_call.1} parent=1 // pred_check_branch
      %23 = sbr.rel (0) target = $region13
    $region12: #{tpu_custom_call.1} parent=1 // pred_region
      _
    $region13: #{tpu_custom_call.1} parent=1 // pred_fallthru
      _
    // Predicated region
    $region14: #{tpu_custom_call.1} parent=1 // pred_check
      _
    $region15: #{tpu_custom_call.1} parent=1 // pred_check_branch
      %25 = sbr.rel (0) target = $region17
    $region16: #{tpu_custom_call.1} parent=1 // pred_region
      _
    $region17: #{tpu_custom_call.1} parent=1 // pred_fallthru
      _
    // Predicated region
    $region18: #{tpu_custom_call.1} parent=1 // pred_check
      _
    $region19: #{tpu_custom_call.1} parent=1 // pred_check_branch
      %27 = sbr.rel (0) target = $region21
    $region20: #{tpu_custom_call.1} parent=1 // pred_region
      _
    $region21: #{tpu_custom_call.1} parent=1 // pred_fallthru
      _
    // Predicated region
    $region22: #{tpu_custom_call.1} parent=1 // pred_check
      _
    $region23: #{tpu_custom_call.1} parent=1 // pred_check_branch
      %29 = sbr.rel (0) target = $region25
    $region24: #{tpu_custom_call.1} parent=1 // pred_region
      _
    $region25: #{tpu_custom_call.1} parent=1 // pred_fallthru
      _
    // Predicated region
    $region26: #{tpu_custom_call.1} parent=1 // pred_check
      _
    $region27: #{tpu_custom_call.1} parent=1 // pred_check_branch
      %31 = sbr.rel (0) target = $region29
    $region28: #{tpu_custom_call.1} parent=1 // pred_region
      _
    $region29: #{tpu_custom_call.1} parent=1 // pred_fallthru
      _
    // Predicated region
    $region30: #{tpu_custom_call.1} parent=1 // pred_check
      _
    $region31: #{tpu_custom_call.1} parent=1 // pred_check_branch
      %33 = sbr.rel (0) target = $region33
    $region32: #{tpu_custom_call.1} parent=1 // pred_region
      _
    $region33: #{tpu_custom_call.1} parent=1 // pred_fallthru
      _
    // Predicated region
    $region34: #{tpu_custom_call.1} parent=1 // pred_check
      _
    $region35: #{tpu_custom_call.1} parent=1 // pred_check_branch
      %35 = sbr.rel (0) target = $region37
    $region36: #{tpu_custom_call.1} parent=1 // pred_region
      _
    $region37: #{tpu_custom_call.1} parent=1 // pred_fallthru
      _
    // Predicated region
    $region38: #{tpu_custom_call.1} parent=1 // pred_check
      _
    $region39: #{tpu_custom_call.1} parent=1 // pred_check_branch
      %37 = sbr.rel (0) target = $region41
    $region40: #{tpu_custom_call.1} parent=1 // pred_region
      _
    $region41: #{tpu_custom_call.1} parent=1 // pred_fallthru
      _
    // Predicated region
    $region42: #{tpu_custom_call.1} parent=1 // pred_check
      _
    $region43: #{tpu_custom_call.1} parent=1 // pred_check_branch
      %39 = sbr.rel (0) target = $region45
    $region44: #{tpu_custom_call.1} parent=1 // pred_region
      _
    $region45: #{tpu_custom_call.1} parent=1 // pred_fallthru
      _
    // Predicated region
    $region46: #{tpu_custom_call.1} parent=1 // pred_check
      _
    $region47: #{tpu_custom_call.1} parent=1 // pred_check_branch
      %41 = sbr.rel (0) target = $region49
    $region48: #{tpu_custom_call.1} parent=1 // pred_region
      _
    $region49: #{tpu_custom_call.1} parent=1 // pred_fallthru
      _
    %v42 = vld [vmem:[%s2] sm:$0xff]
    %v43 = vld [vmem:[%s2 + $0x8] sm:$0xff]
    %v44 = vld [vmem:[%s2 + $0x10] sm:$0xff]
    %v45 = vld [vmem:[%s2 + $0x18] sm:$0xff]
    %v46 = vld [vmem:[%s0] sm:$0xff]
    %v47 = vld [vmem:[%s0 + $0x8] sm:$0xff]
    %v48 = vld [vmem:[%s1] sm:$0xf]
    %v49 = vld [vmem:[%s3] sm:$0x1]
    %v51 = vperm.slane %v49, 0
    %vm53 = vcmask 31744
    %v55 = vsel %vm53, %v46, 0
    %v58 = vsel %vm53, %v47, 0
    %vm60 = vcmask 1043456
    %v62 = vsel %vm60, %v48, 0
    %64 = vmatpush.msra.mxu0 0.0
    %65 = vmatpush.msra.mxu0 0.0
    %66 = vmatpush.msra.mxu0 0.0
    %67 = vmatpush.msra.mxu0 0.0
    %68 = vmatpush.msra.mxu0 0.0
    %69 = vmatpush.msra.mxu0 0.0
    %70 = vmatpush.msra.mxu0 0.0
    %71 = vmatpush.msra.mxu0 0.0
    %72 = vmatpush.msra.mxu0 0.0
    %73 = vmatpush.msra.mxu0 0.0
    %74 = vmatpush.msra.mxu0 0.0
    %75 = vmatpush.msra.mxu0 0.0
    %76 = vmatpush.msra.mxu0 0.0
    %77 = vmatpush.msra.mxu0 0.0
    %78 = vmatpush.msra.mxu0 0.0
    %79 = vmatpush.msra.mxu0 %v62
    %80 = vmatmul.f32.gmra.mxu0 %v55
    %v81 = vpop.f32.mrf.mxu0
    %v82 = vadd.f32 %v51, %v81
    %83 = vmatmul.f32.gmra.mxu0 %v58
    %v84 = vpop.f32.mrf.mxu0
    %v85 = vadd.f32 %v51, %v84
    %86 = vdwg.mxu0
    %v87 = vld [vmem:[%s5] sm:$0x1]
    %v89 = vperm.slane %v87, 0
    %v91 = vxor.u32 %v82, 2147483648
    %v92 = vmul.f32 %v91, 1.442695
    %v93 = vpow.pop %v92
    %v94 = vadd.f32 %v93, 1.0
    %v95 = vrcp.pop %v94
    %v96 = vmul.f32 %v94, %v95
    %v97 = vsub.f32 1.0, %v96
    %v98 = vmul.f32 %v95, %v97
    %v99 = vadd.f32 %v95, %v98
    %vm100 = vweird.f32 %v94
    %vm101 = vweird.f32 %v95
    %vm102 = vmor %vm100, %vm101
    %v103 = vsel %vm102, %v95, %v99
    %v104 = vand.u32 2147483647, %v94
    %vm105 = vcmp.eq.f32.partialorder %v104, 8.507059e+37
    %v106 = vand.u32 %v94, 2147483648
    %v107 = vor.u32 1.1754944e-38, %v106
    %v108 = vsel %vm105, %v107, %v103
    %v109 = vmul.f32 1.0, %v108
    %v110 = vtanh.pop %v82
    %v111 = vmul.f32 %v109, 0.0
    %113 = vrot.lane.b32.xlu0 %v110, 32
    %v114 = vpop.permute.xlu0 %113
    %v116 = vmul.f32 %v109, %v114
    %118 = vrot.lane.b32.xlu0 %v116, 32
    %v119 = vpop.permute.xlu0 %118
    %v121 = vadd.f32 %v111, %v119
    %v122 = vtanh.pop %v121
    %124 = vrot.lane.b32.xlu0 %v122, 32
    %v125 = vpop.permute.xlu0 %124
    %v127 = vmul.f32 %v109, %v125
    %v128 = vld [vmem:[%s4] sm:$0xff]
    %v129 = vld [vmem:[%s4 + $0x8] sm:$0xff]
    %v130 = vld [vmem:[%s4 + $0x10] sm:$0xff]
    %v131 = vld [vmem:[%s4 + $0x18] sm:$0xff]
    %133 = vrot.lane.b32.xlu0 %v127, 64
    %v134 = vpop.permute.xlu0 %133
    %vm135 = vcmask 261120
    %v136 = vsel %vm135, %v134, 0
    %138 = vmatpush.msra.mxu0 0.0
    %139 = vmatpush.msra.mxu0 0.0
    %140 = vmatpush.msra.mxu0 0.0
    %141 = vmatpush.msra.mxu0 0.0
    %142 = vmatpush.msra.mxu0 0.0
    %143 = vmatpush.msra.mxu0 0.0
    %144 = vmatpush.msra.mxu0 0.0
    %145 = vmatpush.msra.mxu0 0.0
    %146 = vmatpush.msra.mxu0 0.0
    %147 = vmatpush.msra.mxu0 0.0
    %148 = vmatpush.msra.mxu0 0.0
    %149 = vmatpush.msra.mxu0 0.0
    %150 = vmatpush.msra.mxu0 %v131
    %151 = vmatpush.msra.mxu0 %v130
    %152 = vmatpush.msra.mxu0 %v129
    %153 = vmatpush.msra.mxu0 %v128
    %154 = vmatmul.f32.gmra.mxu0 %v136
    %v155 = vpop.f32.mrf.mxu0
    %v156 = vadd.f32 0.0, %v155
    %157 = vdwg.mxu0
    %v158 = vadd.f32 %v89, %v156
    %159 = vmatpush.msra.mxu0 0.0
    %160 = vmatpush.msra.mxu0 0.0
    %161 = vmatpush.msra.mxu0 0.0
    %162 = vmatpush.msra.mxu0 0.0
    %163 = vmatpush.msra.mxu0 0.0
    %164 = vmatpush.msra.mxu0 0.0
    %165 = vmatpush.msra.mxu0 0.0
    %166 = vmatpush.msra.mxu0 0.0
    %167 = vmatpush.msra.mxu0 0.0
    %168 = vmatpush.msra.mxu0 0.0
    %169 = vmatpush.msra.mxu0 0.0
    %170 = vmatpush.msra.mxu0 0.0
    %171 = vmatpush.msra.mxu0 %v45
    %172 = vmatpush.msra.mxu0 %v44
    %173 = vmatpush.msra.mxu0 %v43
    %174 = vmatpush.msra.mxu0 %v42
    %175 = vmatmul.f32.gmra.mxu0 %v136
    %v176 = vpop.f32.mrf.mxu0
    %v177 = vadd.f32 0.0, %v176
    %178 = vdwg.mxu0
    %v180 = vrot.slane %v177, 6
    %v182 = vadd.f32 %v82, %v180
    %v183 = vxor.u32 %v182, 2147483648
    %v184 = vmul.f32 %v183, 1.442695
    %v185 = vpow.pop %v184
    %v186 = vadd.f32 %v185, 1.0
    %v187 = vrcp.pop %v186
    %v188 = vmul.f32 %v186, %v187
    %v189 = vsub.f32 1.0, %v188
    %v190 = vmul.f32 %v187, %v189
    %v191 = vadd.f32 %v187, %v190
    %vm192 = vweird.f32 %v186
    %vm193 = vweird.f32 %v187
    %vm194 = vmor %vm192, %vm193
    %v195 = vsel %vm194, %v187, %v191
    %v196 = vand.u32 2147483647, %v186
    %vm197 = vcmp.eq.f32.partialorder %v196, 8.507059e+37
    %v198 = vand.u32 %v186, 2147483648
    %v199 = vor.u32 1.1754944e-38, %v198
    %v200 = vsel %vm197, %v199, %v195
    %v201 = vmul.f32 1.0, %v200
    %v202 = vtanh.pop %v182
    %v204 = vrot.slane %v121, 6
    %v206 = vmul.f32 %v201, %v204
    %208 = vrot.lane.b32.xlu0 %v202, 32
    %v209 = vpop.permute.xlu0 %208
    %v211 = vmul.f32 %v201, %v209
    %213 = vrot.lane.b32.xlu0 %v211, 32
    %v214 = vpop.permute.xlu0 %213
    %v216 = vadd.f32 %v206, %v214
    %v217 = vtanh.pop %v216
    %219 = vrot.lane.b32.xlu0 %v217, 32
    %v220 = vpop.permute.xlu0 %219
    %v222 = vmul.f32 %v201, %v220
    %v223 = vld [vmem:[%s4 + $0x20] sm:$0xff]
    %v224 = vld [vmem:[%s4 + $0x28] sm:$0xff]
    %v225 = vld [vmem:[%s4 + $0x30] sm:$0xff]
    %v226 = vld [vmem:[%s4 + $0x38] sm:$0xff]
    %v228 = vrot.slane %v222, 2
    %229 = vrot.lane.b32.xlu0 %v228, 64
    %v230 = vpop.permute.xlu0 %229
    %v231 = vsel %vm135, %v230, 0
    %233 = vmatpush.msra.mxu0 0.0
    %234 = vmatpush.msra.mxu0 0.0
    %235 = vmatpush.msra.mxu0 0.0
    %236 = vmatpush.msra.mxu0 0.0
    %237 = vmatpush.msra.mxu0 0.0
    %238 = vmatpush.msra.mxu0 0.0
    %239 = vmatpush.msra.mxu0 0.0
    %240 = vmatpush.msra.mxu0 0.0
    %241 = vmatpush.msra.mxu0 0.0
    %242 = vmatpush.msra.mxu0 0.0
    %243 = vmatpush.msra.mxu0 0.0
    %244 = vmatpush.msra.mxu0 0.0
    %245 = vmatpush.msra.mxu0 %v226
    %246 = vmatpush.msra.mxu0 %v225
    %247 = vmatpush.msra.mxu0 %v224
    %248 = vmatpush.msra.mxu0 %v223
    %249 = vmatmul.f32.gmra.mxu0 %v231
    %v250 = vpop.f32.mrf.mxu0
    %v251 = vadd.f32 0.0, %v250
    %252 = vdwg.mxu0
    %v253 = vadd.f32 %v158, %v251
    %254 = vmatpush.msra.mxu0 0.0
    %255 = vmatpush.msra.mxu0 0.0
    %256 = vmatpush.msra.mxu0 0.0
    %257 = vmatpush.msra.mxu0 0.0
    %258 = vmatpush.msra.mxu0 0.0
    %259 = vmatpush.msra.mxu0 0.0
    %260 = vmatpush.msra.mxu0 0.0
    %261 = vmatpush.msra.mxu0 0.0
    %262 = vmatpush.msra.mxu0 0.0
    %263 = vmatpush.msra.mxu0 0.0
    %264 = vmatpush.msra.mxu0 0.0
    %265 = vmatpush.msra.mxu0 0.0
    %266 = vmatpush.msra.mxu0 %v45
    %267 = vmatpush.msra.mxu0 %v44
    %268 = vmatpush.msra.mxu0 %v43
    %269 = vmatpush.msra.mxu0 %v42
    %270 = vmatmul.f32.gmra.mxu0 %v231
    %v271 = vpop.f32.mrf.mxu0
    %v272 = vadd.f32 0.0, %v271
    %273 = vdwg.mxu0
    %v275 = vrot.slane %v272, 4
    %v277 = vadd.f32 %v82, %v275
    %v278 = vxor.u32 %v277, 2147483648
    %v279 = vmul.f32 %v278, 1.442695
    %v280 = vpow.pop %v279
    %v281 = vadd.f32 %v280, 1.0
    %v282 = vrcp.pop %v281
    %v283 = vmul.f32 %v281, %v282
    %v284 = vsub.f32 1.0, %v283
    %v285 = vmul.f32 %v282, %v284
    %v286 = vadd.f32 %v282, %v285
    %vm287 = vweird.f32 %v281
    %vm288 = vweird.f32 %v282
    %vm289 = vmor %vm287, %vm288
    %v290 = vsel %vm289, %v282, %v286
    %v291 = vand.u32 2147483647, %v281
    %vm292 = vcmp.eq.f32.partialorder %v291, 8.507059e+37
    %v293 = vand.u32 %v281, 2147483648
    %v294 = vor.u32 1.1754944e-38, %v293
    %v295 = vsel %vm292, %v294, %v290
    %v296 = vmul.f32 1.0, %v295
    %v297 = vtanh.pop %v277
    %v299 = vrot.slane %v216, 6
    %v301 = vmul.f32 %v296, %v299
    %303 = vrot.lane.b32.xlu0 %v297, 32
    %v304 = vpop.permute.xlu0 %303
    %v306 = vmul.f32 %v296, %v304
    %308 = vrot.lane.b32.xlu0 %v306, 32
    %v309 = vpop.permute.xlu0 %308
    %v311 = vadd.f32 %v301, %v309
    %v312 = vtanh.pop %v311
    %314 = vrot.lane.b32.xlu0 %v312, 32
    %v315 = vpop.permute.xlu0 %314
    %v317 = vmul.f32 %v296, %v315
    %v318 = vld [vmem:[%s4 + $0x40] sm:$0xff]
    %v319 = vld [vmem:[%s4 + $0x48] sm:$0xff]
    %v320 = vld [vmem:[%s4 + $0x50] sm:$0xff]
    %v321 = vld [vmem:[%s4 + $0x58] sm:$0xff]
    %v323 = vrot.slane %v317, 4
    %324 = vrot.lane.b32.xlu0 %v323, 64
    %v325 = vpop.permute.xlu0 %324
    %v326 = vsel %vm135, %v325, 0
    %328 = vmatpush.msra.mxu0 0.0
    %329 = vmatpush.msra.mxu0 0.0
    %330 = vmatpush.msra.mxu0 0.0
    %331 = vmatpush.msra.mxu0 0.0
    %332 = vmatpush.msra.mxu0 0.0
    %333 = vmatpush.msra.mxu0 0.0
    %334 = vmatpush.msra.mxu0 0.0
    %335 = vmatpush.msra.mxu0 0.0
    %336 = vmatpush.msra.mxu0 0.0
    %337 = vmatpush.msra.mxu0 0.0
    %338 = vmatpush.msra.mxu0 0.0
    %339 = vmatpush.msra.mxu0 0.0
    %340 = vmatpush.msra.mxu0 %v321
    %341 = vmatpush.msra.mxu0 %v320
    %342 = vmatpush.msra.mxu0 %v319
    %343 = vmatpush.msra.mxu0 %v318
    %344 = vmatmul.f32.gmra.mxu0 %v326
    %v345 = vpop.f32.mrf.mxu0
    %v346 = vadd.f32 0.0, %v345
    %347 = vdwg.mxu0
    %v348 = vadd.f32 %v253, %v346
    %349 = vmatpush.msra.mxu0 0.0
    %350 = vmatpush.msra.mxu0 0.0
    %351 = vmatpush.msra.mxu0 0.0
    %352 = vmatpush.msra.mxu0 0.0
    %353 = vmatpush.msra.mxu0 0.0
    %354 = vmatpush.msra.mxu0 0.0
    %355 = vmatpush.msra.mxu0 0.0
    %356 = vmatpush.msra.mxu0 0.0
    %357 = vmatpush.msra.mxu0 0.0
    %358 = vmatpush.msra.mxu0 0.0
    %359 = vmatpush.msra.mxu0 0.0
    %360 = vmatpush.msra.mxu0 0.0
    %361 = vmatpush.msra.mxu0 %v45
    %362 = vmatpush.msra.mxu0 %v44
    %363 = vmatpush.msra.mxu0 %v43
    %364 = vmatpush.msra.mxu0 %v42
    %365 = vmatmul.f32.gmra.mxu0 %v326
    %v366 = vpop.f32.mrf.mxu0
    %v367 = vadd.f32 0.0, %v366
    %368 = vdwg.mxu0
    %v370 = vrot.slane %v367, 2
    %v372 = vadd.f32 %v82, %v370
    %v373 = vxor.u32 %v372, 2147483648
    %v374 = vmul.f32 %v373, 1.442695
    %v375 = vpow.pop %v374
    %v376 = vadd.f32 %v375, 1.0
    %v377 = vrcp.pop %v376
    %v378 = vmul.f32 %v376, %v377
    %v379 = vsub.f32 1.0, %v378
    %v380 = vmul.f32 %v377, %v379
    %v381 = vadd.f32 %v377, %v380
    %vm382 = vweird.f32 %v376
    %vm383 = vweird.f32 %v377
    %vm384 = vmor %vm382, %vm383
    %v385 = vsel %vm384, %v377, %v381
    %v386 = vand.u32 2147483647, %v376
    %vm387 = vcmp.eq.f32.partialorder %v386, 8.507059e+37
    %v388 = vand.u32 %v376, 2147483648
    %v389 = vor.u32 1.1754944e-38, %v388
    %v390 = vsel %vm387, %v389, %v385
    %v391 = vmul.f32 1.0, %v390
    %v392 = vtanh.pop %v372
    %v394 = vrot.slane %v311, 6
    %v396 = vmul.f32 %v391, %v394
    %398 = vrot.lane.b32.xlu0 %v392, 32
    %v399 = vpop.permute.xlu0 %398
    %v401 = vmul.f32 %v391, %v399
    %403 = vrot.lane.b32.xlu0 %v401, 32
    %v404 = vpop.permute.xlu0 %403
    %v406 = vadd.f32 %v396, %v404
    %v407 = vtanh.pop %v406
    %409 = vrot.lane.b32.xlu0 %v407, 32
    %v410 = vpop.permute.xlu0 %409
    %v412 = vmul.f32 %v391, %v410
    %v413 = vld [vmem:[%s4 + $0x60] sm:$0xff]
    %v414 = vld [vmem:[%s4 + $0x68] sm:$0xff]
    %v415 = vld [vmem:[%s4 + $0x70] sm:$0xff]
    %v416 = vld [vmem:[%s4 + $0x78] sm:$0xff]
    %v418 = vrot.slane %v412, 6
    %419 = vrot.lane.b32.xlu0 %v418, 64
    %v420 = vpop.permute.xlu0 %419
    %v421 = vsel %vm135, %v420, 0
    %423 = vmatpush.msra.mxu0 0.0
    %424 = vmatpush.msra.mxu0 0.0
    %425 = vmatpush.msra.mxu0 0.0
    %426 = vmatpush.msra.mxu0 0.0
    %427 = vmatpush.msra.mxu0 0.0
    %428 = vmatpush.msra.mxu0 0.0
    %429 = vmatpush.msra.mxu0 0.0
    %430 = vmatpush.msra.mxu0 0.0
    %431 = vmatpush.msra.mxu0 0.0
    %432 = vmatpush.msra.mxu0 0.0
    %433 = vmatpush.msra.mxu0 0.0
    %434 = vmatpush.msra.mxu0 0.0
    %435 = vmatpush.msra.mxu0 %v416
    %436 = vmatpush.msra.mxu0 %v415
    %437 = vmatpush.msra.mxu0 %v414
    %438 = vmatpush.msra.mxu0 %v413
    %439 = vmatmul.f32.gmra.mxu0 %v421
    %v440 = vpop.f32.mrf.mxu0
    %v441 = vadd.f32 0.0, %v440
    %442 = vdwg.mxu0
    %v443 = vadd.f32 %v348, %v441
    %444 = vmatpush.msra.mxu0 0.0
    %445 = vmatpush.msra.mxu0 0.0
    %446 = vmatpush.msra.mxu0 0.0
    %447 = vmatpush.msra.mxu0 0.0
    %448 = vmatpush.msra.mxu0 0.0
    %449 = vmatpush.msra.mxu0 0.0
    %450 = vmatpush.msra.mxu0 0.0
    %451 = vmatpush.msra.mxu0 0.0
    %452 = vmatpush.msra.mxu0 0.0
    %453 = vmatpush.msra.mxu0 0.0
    %454 = vmatpush.msra.mxu0 0.0
    %455 = vmatpush.msra.mxu0 0.0
    %456 = vmatpush.msra.mxu0 %v45
    %457 = vmatpush.msra.mxu0 %v44
    %458 = vmatpush.msra.mxu0 %v43
    %459 = vmatpush.msra.mxu0 %v42
    %460 = vmatmul.f32.gmra.mxu0 %v421
    %v461 = vpop.f32.mrf.mxu0
    %v462 = vadd.f32 0.0, %v461
    %463 = vdwg.mxu0
    %v464 = vadd.f32 %v85, %v462
    %v465 = vxor.u32 %v464, 2147483648
    %v466 = vmul.f32 %v465, 1.442695
    %v467 = vpow.pop %v466
    %v468 = vadd.f32 %v467, 1.0
    %v469 = vrcp.pop %v468
    %v470 = vmul.f32 %v468, %v469
    %v471 = vsub.f32 1.0, %v470
    %v472 = vmul.f32 %v469, %v471
    %v473 = vadd.f32 %v469, %v472
    %vm474 = vweird.f32 %v468
    %vm475 = vweird.f32 %v469
    %vm476 = vmor %vm474, %vm475
    %v477 = vsel %vm476, %v469, %v473
    %v478 = vand.u32 2147483647, %v468
    %vm479 = vcmp.eq.f32.partialorder %v478, 8.507059e+37
    %v480 = vand.u32 %v468, 2147483648
    %v481 = vor.u32 1.1754944e-38, %v480
    %v482 = vsel %vm479, %v481, %v477
    %v483 = vmul.f32 1.0, %v482
    %v484 = vtanh.pop %v464
    %v486 = vrot.slane %v406, 6
    %v488 = vmul.f32 %v483, %v486
    %490 = vrot.lane.b32.xlu0 %v484, 32
    %v491 = vpop.permute.xlu0 %490
    %v493 = vmul.f32 %v483, %v491
    %495 = vrot.lane.b32.xlu0 %v493, 32
    %v496 = vpop.permute.xlu0 %495
    %v498 = vadd.f32 %v488, %v496
    %v499 = vtanh.pop %v498
    %501 = vrot.lane.b32.xlu0 %v499, 32
    %v502 = vpop.permute.xlu0 %501
    %v504 = vmul.f32 %v483, %v502
    %v505 = vld [vmem:[%s4 + $0x80] sm:$0xff]
    %v506 = vld [vmem:[%s4 + $0x88] sm:$0xff]
    %v507 = vld [vmem:[%s4 + $0x90] sm:$0xff]
    %v508 = vld [vmem:[%s4 + $0x98] sm:$0xff]
    %510 = vrot.lane.b32.xlu0 %v504, 64
    %v511 = vpop.permute.xlu0 %510
    %v512 = vsel %vm135, %v511, 0
    %514 = vmatpush.msra.mxu0 0.0
    %515 = vmatpush.msra.mxu0 0.0
    %516 = vmatpush.msra.mxu0 0.0
    %517 = vmatpush.msra.mxu0 0.0
    %518 = vmatpush.msra.mxu0 0.0
    %519 = vmatpush.msra.mxu0 0.0
    %520 = vmatpush.msra.mxu0 0.0
    %521 = vmatpush.msra.mxu0 0.0
    %522 = vmatpush.msra.mxu0 0.0
    %523 = vmatpush.msra.mxu0 0.0
    %524 = vmatpush.msra.mxu0 0.0
    %525 = vmatpush.msra.mxu0 0.0
    %526 = vmatpush.msra.mxu0 %v508
    %527 = vmatpush.msra.mxu0 %v507
    %528 = vmatpush.msra.mxu0 %v506
    %529 = vmatpush.msra.mxu0 %v505
    %530 = vmatmul.f32.gmra.mxu0 %v512
    %v531 = vpop.f32.mrf.mxu0
    %v532 = vadd.f32 0.0, %v531
    %533 = vdwg.mxu0
    %v534 = vadd.f32 %v443, %v532
    %535 = vmatpush.msra.mxu0 0.0
    %536 = vmatpush.msra.mxu0 0.0
    %537 = vmatpush.msra.mxu0 0.0
    %538 = vmatpush.msra.mxu0 0.0
    %539 = vmatpush.msra.mxu0 0.0
    %540 = vmatpush.msra.mxu0 0.0
    %541 = vmatpush.msra.mxu0 0.0
    %542 = vmatpush.msra.mxu0 0.0
    %543 = vmatpush.msra.mxu0 0.0
    %544 = vmatpush.msra.mxu0 0.0
    %545 = vmatpush.msra.mxu0 0.0
    %546 = vmatpush.msra.mxu0 0.0
    %547 = vmatpush.msra.mxu0 %v45
    %548 = vmatpush.msra.mxu0 %v44
    %549 = vmatpush.msra.mxu0 %v43
    %550 = vmatpush.msra.mxu0 %v42
    %551 = vmatmul.f32.gmra.mxu0 %v512
    %v552 = vpop.f32.mrf.mxu0
    %v553 = vadd.f32 0.0, %v552
    %554 = vdwg.mxu0
    %v556 = vrot.slane %v553, 6
    %v558 = vadd.f32 %v85, %v556
    %v559 = vxor.u32 %v558, 2147483648
    %v560 = vmul.f32 %v559, 1.442695
    %v561 = vpow.pop %v560
    %v562 = vadd.f32 %v561, 1.0
    %v563 = vrcp.pop %v562
    %v564 = vmul.f32 %v562, %v563
    %v565 = vsub.f32 1.0, %v564
    %v566 = vmul.f32 %v563, %v565
    %v567 = vadd.f32 %v563, %v566
    %vm568 = vweird.f32 %v562
    %vm569 = vweird.f32 %v563
    %vm570 = vmor %vm568, %vm569
    %v571 = vsel %vm570, %v563, %v567
    %v572 = vand.u32 2147483647, %v562
    %vm573 = vcmp.eq.f32.partialorder %v572, 8.507059e+37
    %v574 = vand.u32 %v562, 2147483648
    %v575 = vor.u32 1.1754944e-38, %v574
    %v576 = vsel %vm573, %v575, %v571
    %v577 = vmul.f32 1.0, %v576
    %v578 = vtanh.pop %v558
    %v580 = vrot.slane %v498, 6
    %v582 = vmul.f32 %v577, %v580
    %584 = vrot.lane.b32.xlu0 %v578, 32
    %v585 = vpop.permute.xlu0 %584
    %v587 = vmul.f32 %v577, %v585
    %589 = vrot.lane.b32.xlu0 %v587, 32
    %v590 = vpop.permute.xlu0 %589
    %v592 = vadd.f32 %v582, %v590
    %v593 = vtanh.pop %v592
    %595 = vrot.lane.b32.xlu0 %v593, 32
    %v596 = vpop.permute.xlu0 %595
    %v598 = vmul.f32 %v577, %v596
    %v599 = vld [vmem:[%s4 + $0xa0] sm:$0xff]
    %v600 = vld [vmem:[%s4 + $0xa8] sm:$0xff]
    %v601 = vld [vmem:[%s4 + $0xb0] sm:$0xff]
    %v602 = vld [vmem:[%s4 + $0xb8] sm:$0xff]
    %v604 = vrot.slane %v598, 2
    %605 = vrot.lane.b32.xlu0 %v604, 64
    %v606 = vpop.permute.xlu0 %605
    %v607 = vsel %vm135, %v606, 0
    %609 = vmatpush.msra.mxu0 0.0
    %610 = vmatpush.msra.mxu0 0.0
    %611 = vmatpush.msra.mxu0 0.0
    %612 = vmatpush.msra.mxu0 0.0
    %613 = vmatpush.msra.mxu0 0.0
    %614 = vmatpush.msra.mxu0 0.0
    %615 = vmatpush.msra.mxu0 0.0
    %616 = vmatpush.msra.mxu0 0.0
    %617 = vmatpush.msra.mxu0 0.0
    %618 = vmatpush.msra.mxu0 0.0
    %619 = vmatpush.msra.mxu0 0.0
    %620 = vmatpush.msra.mxu0 0.0
    %621 = vmatpush.msra.mxu0 %v602
    %622 = vmatpush.msra.mxu0 %v601
    %623 = vmatpush.msra.mxu0 %v600
    %624 = vmatpush.msra.mxu0 %v599
    %625 = vmatmul.f32.gmra.mxu0 %v607
    %v626 = vpop.f32.mrf.mxu0
    %v627 = vadd.f32 0.0, %v626
    %628 = vdwg.mxu0
    %v629 = vadd.f32 %v534, %v627
    %630 = vmatpush.msra.mxu0 0.0
    %631 = vmatpush.msra.mxu0 0.0
    %632 = vmatpush.msra.mxu0 0.0
    %633 = vmatpush.msra.mxu0 0.0
    %634 = vmatpush.msra.mxu0 0.0
    %635 = vmatpush.msra.mxu0 0.0
    %636 = vmatpush.msra.mxu0 0.0
    %637 = vmatpush.msra.mxu0 0.0
    %638 = vmatpush.msra.mxu0 0.0
    %639 = vmatpush.msra.mxu0 0.0
    %640 = vmatpush.msra.mxu0 0.0
    %641 = vmatpush.msra.mxu0 0.0
    %642 = vmatpush.msra.mxu0 %v45
    %643 = vmatpush.msra.mxu0 %v44
    %644 = vmatpush.msra.mxu0 %v43
    %645 = vmatpush.msra.mxu0 %v42
    %646 = vmatmul.f32.gmra.mxu0 %v607
    %v647 = vpop.f32.mrf.mxu0
    %v648 = vadd.f32 0.0, %v647
    %649 = vdwg.mxu0
    %v651 = vrot.slane %v648, 4
    %v653 = vadd.f32 %v85, %v651
    %v654 = vxor.u32 %v653, 2147483648
    %v655 = vmul.f32 %v654, 1.442695
    %v656 = vpow.pop %v655
    %v657 = vadd.f32 %v656, 1.0
    %v658 = vrcp.pop %v657
    %v659 = vmul.f32 %v657, %v658
    %v660 = vsub.f32 1.0, %v659
    %v661 = vmul.f32 %v658, %v660
    %v662 = vadd.f32 %v658, %v661
    %vm663 = vweird.f32 %v657
    %vm664 = vweird.f32 %v658
    %vm665 = vmor %vm663, %vm664
    %v666 = vsel %vm665, %v658, %v662
    %v667 = vand.u32 2147483647, %v657
    %vm668 = vcmp.eq.f32.partialorder %v667, 8.507059e+37
    %v669 = vand.u32 %v657, 2147483648
    %v670 = vor.u32 1.1754944e-38, %v669
    %v671 = vsel %vm668, %v670, %v666
    %v672 = vmul.f32 1.0, %v671
    %v673 = vtanh.pop %v653
    %v675 = vrot.slane %v592, 6
    %v677 = vmul.f32 %v672, %v675
    %679 = vrot.lane.b32.xlu0 %v673, 32
    %v680 = vpop.permute.xlu0 %679
    %v682 = vmul.f32 %v672, %v680
    %684 = vrot.lane.b32.xlu0 %v682, 32
    %v685 = vpop.permute.xlu0 %684
    %v687 = vadd.f32 %v677, %v685
    %v688 = vtanh.pop %v687
    %690 = vrot.lane.b32.xlu0 %v688, 32
    %v691 = vpop.permute.xlu0 %690
    %v693 = vmul.f32 %v672, %v691
    %v694 = vld [vmem:[%s4 + $0xc0] sm:$0xff]
    %v695 = vld [vmem:[%s4 + $0xc8] sm:$0xff]
    %v696 = vld [vmem:[%s4 + $0xd0] sm:$0xff]
    %v697 = vld [vmem:[%s4 + $0xd8] sm:$0xff]
    %v699 = vrot.slane %v693, 4
    %700 = vrot.lane.b32.xlu0 %v699, 64
    %v701 = vpop.permute.xlu0 %700
    %v702 = vsel %vm135, %v701, 0
    %704 = vmatpush.msra.mxu0 0.0
    %705 = vmatpush.msra.mxu0 0.0
    %706 = vmatpush.msra.mxu0 0.0
    %707 = vmatpush.msra.mxu0 0.0
    %708 = vmatpush.msra.mxu0 0.0
    %709 = vmatpush.msra.mxu0 0.0
    %710 = vmatpush.msra.mxu0 0.0
    %711 = vmatpush.msra.mxu0 0.0
    %712 = vmatpush.msra.mxu0 0.0
    %713 = vmatpush.msra.mxu0 0.0
    %714 = vmatpush.msra.mxu0 0.0
    %715 = vmatpush.msra.mxu0 0.0
    %716 = vmatpush.msra.mxu0 %v697
    %717 = vmatpush.msra.mxu0 %v696
    %718 = vmatpush.msra.mxu0 %v695
    %719 = vmatpush.msra.mxu0 %v694
    %720 = vmatmul.f32.gmra.mxu0 %v702
    %v721 = vpop.f32.mrf.mxu0
    %v722 = vadd.f32 0.0, %v721
    %723 = vdwg.mxu0
    %v724 = vadd.f32 %v629, %v722
    %725 = vmatpush.msra.mxu0 0.0
    %726 = vmatpush.msra.mxu0 0.0
    %727 = vmatpush.msra.mxu0 0.0
    %728 = vmatpush.msra.mxu0 0.0
    %729 = vmatpush.msra.mxu0 0.0
    %730 = vmatpush.msra.mxu0 0.0
    %731 = vmatpush.msra.mxu0 0.0
    %732 = vmatpush.msra.mxu0 0.0
    %733 = vmatpush.msra.mxu0 0.0
    %734 = vmatpush.msra.mxu0 0.0
    %735 = vmatpush.msra.mxu0 0.0
    %736 = vmatpush.msra.mxu0 0.0
    %737 = vmatpush.msra.mxu0 %v45
    %738 = vmatpush.msra.mxu0 %v44
    %739 = vmatpush.msra.mxu0 %v43
    %740 = vmatpush.msra.mxu0 %v42
    %741 = vmatmul.f32.gmra.mxu0 %v702
    %v742 = vpop.f32.mrf.mxu0
    %v743 = vadd.f32 0.0, %v742
    %744 = vdwg.mxu0
    %v746 = vrot.slane %v743, 2
    %v748 = vadd.f32 %v85, %v746
    %v749 = vxor.u32 %v748, 2147483648
    %v750 = vmul.f32 %v749, 1.442695
    %v751 = vpow.pop %v750
    %v752 = vadd.f32 %v751, 1.0
    %v753 = vrcp.pop %v752
    %v754 = vmul.f32 %v752, %v753
    %v755 = vsub.f32 1.0, %v754
    %v756 = vmul.f32 %v753, %v755
    %v757 = vadd.f32 %v753, %v756
    %vm758 = vweird.f32 %v752
    %vm759 = vweird.f32 %v753
    %vm760 = vmor %vm758, %vm759
    %v761 = vsel %vm760, %v753, %v757
    %v762 = vand.u32 2147483647, %v752
    %vm763 = vcmp.eq.f32.partialorder %v762, 8.507059e+37
    %v764 = vand.u32 %v752, 2147483648
    %v765 = vor.u32 1.1754944e-38, %v764
    %v766 = vsel %vm763, %v765, %v761
    %v767 = vmul.f32 1.0, %v766
    %v768 = vtanh.pop %v748
    %v770 = vrot.slane %v687, 6
    %v772 = vmul.f32 %v767, %v770
    %774 = vrot.lane.b32.xlu0 %v768, 32
    %v775 = vpop.permute.xlu0 %774
    %v777 = vmul.f32 %v767, %v775
    %779 = vrot.lane.b32.xlu0 %v777, 32
    %v780 = vpop.permute.xlu0 %779
    %v782 = vadd.f32 %v772, %v780
    %v783 = vtanh.pop %v782
    %785 = vrot.lane.b32.xlu0 %v783, 32
    %v786 = vpop.permute.xlu0 %785
    %v788 = vmul.f32 %v767, %v786
    %v789 = vld [vmem:[%s4 + $0xe0] sm:$0xff]
    %v790 = vld [vmem:[%s4 + $0xe8] sm:$0xff]
    %v791 = vld [vmem:[%s4 + $0xf0] sm:$0xff]
    %v792 = vld [vmem:[%s4 + $0xf8] sm:$0xff]
    %v794 = vrot.slane %v788, 6
    %795 = vrot.lane.b32.xlu0 %v794, 64
    %v796 = vpop.permute.xlu0 %795
    %v797 = vsel %vm135, %v796, 0
    %799 = vmatpush.msra.mxu0 0.0
    %800 = vmatpush.msra.mxu0 0.0
    %801 = vmatpush.msra.mxu0 0.0
    %802 = vmatpush.msra.mxu0 0.0
    %803 = vmatpush.msra.mxu0 0.0
    %804 = vmatpush.msra.mxu0 0.0
    %805 = vmatpush.msra.mxu0 0.0
    %806 = vmatpush.msra.mxu0 0.0
    %807 = vmatpush.msra.mxu0 0.0
    %808 = vmatpush.msra.mxu0 0.0
    %809 = vmatpush.msra.mxu0 0.0
    %810 = vmatpush.msra.mxu0 0.0
    %811 = vmatpush.msra.mxu0 %v792
    %812 = vmatpush.msra.mxu0 %v791
    %813 = vmatpush.msra.mxu0 %v790
    %814 = vmatpush.msra.mxu0 %v789
    %815 = vmatmul.f32.gmra.mxu0 %v797
    %v816 = vpop.f32.mrf.mxu0
    %v817 = vadd.f32 0.0, %v816
    %818 = vdwg.mxu0
    %v819 = vadd.f32 %v724, %v817
    %v820 = vld [vmem:[%s6] sm:$0xff]
    %v821 = vld [vmem:[%s6 + $0x8] sm:$0xff]
    %v822 = vld [vmem:[%s6 + $0x10] sm:$0xff]
    %v823 = vld [vmem:[%s6 + $0x18] sm:$0xff]
    %v824 = vld [vmem:[%s6 + $0x20] sm:$0xff]
    %v825 = vld [vmem:[%s6 + $0x28] sm:$0xff]
    %v826 = vld [vmem:[%s6 + $0x30] sm:$0xff]
    %v827 = vld [vmem:[%s6 + $0x38] sm:$0xff]
    %v828 = vld [vmem:[%s7] sm:$0x1]
    %v829 = vmax.f32 %v819, 0.0
    %v831 = vperm.slane %v828, 0
    %vm833 = vcmask 523264
    %v835 = vsel %vm833, %v829, 0
    %837 = vmatpush.msra.mxu0 0.0
    %838 = vmatpush.msra.mxu0 0.0
    %839 = vmatpush.msra.mxu0 0.0
    %840 = vmatpush.msra.mxu0 0.0
    %841 = vmatpush.msra.mxu0 0.0
    %842 = vmatpush.msra.mxu0 0.0
    %843 = vmatpush.msra.mxu0 0.0
    %844 = vmatpush.msra.mxu0 0.0
    %845 = vmatpush.msra.mxu0 %v827
    %846 = vmatpush.msra.mxu0 %v826
    %847 = vmatpush.msra.mxu0 %v825
    %848 = vmatpush.msra.mxu0 %v824
    %849 = vmatpush.msra.mxu0 %v823
    %850 = vmatpush.msra.mxu0 %v822
    %851 = vmatpush.msra.mxu0 %v821
    %852 = vmatpush.msra.mxu0 %v820
    %853 = vmatmul.f32.gmra.mxu0 %v835
    %v854 = vpop.f32.mrf.mxu0
    %v855 = vadd.f32 %v831, %v854
    %856 = vdwg.mxu0
    %v857 = vld [vmem:[%s8] sm:$0xff]
    %v858 = vld [vmem:[%s8 + $0x8] sm:$0xff]
    %v859 = vld [vmem:[%s8 + $0x10] sm:$0xff]
    %v860 = vld [vmem:[%s8 + $0x18] sm:$0xff]
    %v861 = vld [vmem:[%s8 + $0x20] sm:$0xff]
    %v862 = vld [vmem:[%s8 + $0x28] sm:$0xff]
    %v863 = vld [vmem:[%s8 + $0x30] sm:$0xff]
    %v864 = vld [vmem:[%s8 + $0x38] sm:$0xff]
    %v865 = vld [vmem:[%s9] sm:$0x1]
    %v866 = vmax.f32 %v855, 0.0
    %v868 = vperm.slane %v865, 0
    %v871 = vsel %vm833, %v866, 0
    %873 = vmatpush.msra.mxu0 0.0
    %874 = vmatpush.msra.mxu0 0.0
    %875 = vmatpush.msra.mxu0 0.0
    %876 = vmatpush.msra.mxu0 0.0
    %877 = vmatpush.msra.mxu0 0.0
    %878 = vmatpush.msra.mxu0 0.0
    %879 = vmatpush.msra.mxu0 0.0
    %880 = vmatpush.msra.mxu0 0.0
    %881 = vmatpush.msra.mxu0 %v864
    %882 = vmatpush.msra.mxu0 %v863
    %883 = vmatpush.msra.mxu0 %v862
    %884 = vmatpush.msra.mxu0 %v861
    %885 = vmatpush.msra.mxu0 %v860
    %886 = vmatpush.msra.mxu0 %v859
    %887 = vmatpush.msra.mxu0 %v858
    %888 = vmatpush.msra.mxu0 %v857
    %889 = vmatmul.f32.gmra.mxu0 %v871
    %v890 = vpop.f32.mrf.mxu0
    %v891 = vadd.f32 %v868, %v890
    %892 = vdwg.mxu0
    %v893 = vld [vmem:[%s10] sm:$0xff]
    %v894 = vld [vmem:[%s10 + $0x8] sm:$0xff]
    %v895 = vld [vmem:[%s10 + $0x10] sm:$0xff]
    %v896 = vld [vmem:[%s10 + $0x18] sm:$0xff]
    %v897 = vld [vmem:[%s10 + $0x20] sm:$0xff]
    %v898 = vld [vmem:[%s10 + $0x28] sm:$0xff]
    %v899 = vld [vmem:[%s10 + $0x30] sm:$0xff]
    %v900 = vld [vmem:[%s10 + $0x38] sm:$0xff]
    %v901 = vld [vmem:[%s11] sm:$0x1]
    %v902 = vmax.f32 %v891, 0.0
    %v904 = vperm.slane %v901, 0
    %v907 = vsel %vm833, %v902, 0
    %909 = vmatpush.msra.mxu0 0.0
    %910 = vmatpush.msra.mxu0 0.0
    %911 = vmatpush.msra.mxu0 0.0
    %912 = vmatpush.msra.mxu0 0.0
    %913 = vmatpush.msra.mxu0 0.0
    %914 = vmatpush.msra.mxu0 0.0
    %915 = vmatpush.msra.mxu0 0.0
    %916 = vmatpush.msra.mxu0 0.0
    %917 = vmatpush.msra.mxu0 %v900
    %918 = vmatpush.msra.mxu0 %v899
    %919 = vmatpush.msra.mxu0 %v898
    %920 = vmatpush.msra.mxu0 %v897
    %921 = vmatpush.msra.mxu0 %v896
    %922 = vmatpush.msra.mxu0 %v895
    %923 = vmatpush.msra.mxu0 %v894
    %924 = vmatpush.msra.mxu0 %v893
    %925 = vmatmul.f32.gmra.mxu0 %v907
    %v926 = vpop.f32.mrf.mxu0
    %v927 = vadd.f32 %v904, %v926
    %928 = vdwg.mxu0
    %vm929 = vcmask 58368
    %930 = vst.msk [vmem:[#allocation2] sm:$0x3] %vm929, %v927
    // Predicated region
    $region50: #{tpu_custom_call.1} parent=1 // pred_check
      _
    $region51: #{tpu_custom_call.1} parent=1 // pred_check_branch
      %932 = sbr.rel (0) target = $region53
    $region52: #{tpu_custom_call.1} parent=1 // pred_region
      %934 = vsyncadd [#allocation3], 0
      %s936 = sshll.u32 [#allocation2], 4
      %s937 = int_to_ptr.vmem [resolvable:$true] %s936
      %s938 = sshll.u32 %s12, 4
      %s939 = int_to_ptr.hbm [resolvable:$true] %s938
      %941 = dma.vmem_to_hbm [thread:$0]  %s937, 32, %s939, [#allocation3]
    $region53: #{tpu_custom_call.1} parent=1 // pred_fallthru
      _
    // Predicated region
    $region54: #{tpu_custom_call.1} parent=1 // pred_check
      _
    $region55: #{tpu_custom_call.1} parent=1 // pred_check_branch
      %943 = sbr.rel (0) target = $region57
    $region56: #{tpu_custom_call.1} parent=1 // pred_region
      %945 = dma.done [#allocation3], 32
    $region57: #{tpu_custom_call.1} parent=1 // pred_fallthru
      _
    %946 = vsyncpa [#allocation3], 1

</llo_original>
